<compile_context>
chip_gen: v7x
topology: tpu7x:2x2x1
jax: 0.10.0
libtpu: 0.0.40
codegen_flags: <defaults>
</compile_context>

<pallas_src>
import math

import jax
import jax.numpy as jnp
from jax.experimental import pallas as pl
from jax.experimental.pallas import tpu as pltpu


def _cdiv(a, b):
    return -(-a // b)


def _round_up(x, m):
    return _cdiv(x, m) * m


def _vmem_capacity_bytes():
    """Physical VMEM per TensorCore; conservative (v7x-sized) fallback."""
    try:
        info = pltpu.get_tpu_info()
        cap = getattr(info, "vmem_capacity_bytes", None)
        if cap:
            return int(cap)
    except Exception:
        pass
    return 64 << 20


def _lora_kernel(res_ref, x_ref, a_ref, b_ref, o_ref):
    # dropout is identity in eval mode.
    x = x_ref[...]
    # lora_a: (tm, in) @ (in, r) -> f32 (tm, r). Scaling already folded into B^T.
    h = jnp.dot(x, a_ref[...], preferred_element_type=jnp.float32)
    # Only the tiny rank-r intermediate changes dtype (no (tm,in)/(r,out) casts).
    h = h.astype(b_ref.dtype)
    # lora_b: (tm, r) @ (r, out) -> f32 (tm, out).
    y = jnp.dot(h, b_ref[...], preferred_element_type=jnp.float32)
    # residual + result_lora.to(residual.dtype)
    o_ref[...] = res_ref[...] + y.astype(o_ref.dtype)


def _pick_tile(n_tok, in_features, out_features, r,
               x_bytes, res_bytes, w_bytes, sublane, tm=None):
    vmem_cap = _vmem_capacity_bytes()
    small_vmem = vmem_cap <= (64 << 20)       # v7x-class: 64 MiB VMEM, 2 TCs
    budget = (40 << 20) if small_vmem else (88 << 20)
    limit_cap = (56 << 20) if small_vmem else (110 << 20)

    # Per-token-row VMEM bytes: double-buffered hidden / residual / output
    # tiles plus the in-kernel f32 temporaries (y tile, rank-r intermediate).
    per_row = (2 * (in_features * x_bytes + 2 * out_features * res_bytes)
               + 4 * out_features + 4 * r)
    # Weight blocks (A^T + scaled B^T in the feed dtype), counted double-buffered.
    weight_bytes = 2 * r * (in_features + out_features) * w_bytes

    tm_fit = (budget - weight_bytes) // max(per_row, 1)
    tm_fit = max(sublane, (tm_fit // sublane) * sublane)

    if tm is None:
        tm = min(tm_fit, 1024)
        if small_vmem and n_tok > sublane:
            # 2 TensorCores share the "parallel" grid axis: keep >= 2 steps.
            tm = min(tm, _round_up(_cdiv(n_tok, 2), sublane))

    # Never exceed what fits in the budget, nor the (rounded) token count.
    tm = min(tm, tm_fit, _round_up(n_tok, sublane))
    tm = max(sublane, (tm // sublane) * sublane)

    vmem_need = weight_bytes + per_row * tm
    vmem_limit = int(min(max(vmem_need * 5 // 4 + (4 << 20), 32 << 20), limit_cap))
    return tm, vmem_limit


def lora_forward(residual, hidden_states, lora_a_w, lora_b_w, scaling,
                 *, tm=None, alias_residual=False):
    """residual: (N, out), hidden_states: (N, in),
    lora_a_w: (r, in)  [torch nn.Linear weight layout],
    lora_b_w: (out, r) [torch nn.Linear weight layout]."""
    n_tok, in_features = hidden_states.shape
    out_features = residual.shape[-1]
    r = lora_a_w.shape[0]

    compute_dtype = hidden_states.dtype
    # One-time host-side prep (r*(in+out) elements, fused by XLA):
    #  * A -> (in, r) so the kernel runs a plain NN matmul,
    #  * B -> lane-dense (r, out) with the LoRA scaling folded in,
    #  * both cast to the MXU feed dtype (= hidden dtype).
    a_t = lora_a_w.T.astype(compute_dtype)
    b_t = (lora_b_w * float(scaling)).T.astype(compute_dtype)

    x_bytes = jnp.dtype(hidden_states.dtype).itemsize
    res_bytes = jnp.dtype(residual.dtype).itemsize
    w_bytes = jnp.dtype(compute_dtype).itemsize
    # Sublane multiple for the token axis: 8 (f32) / 16 (bf16) / 32 (int8).
    sublane = max(8, 32 // min(x_bytes, res_bytes))

    tm, vmem_limit = _pick_tile(n_tok, in_features, out_features, r,
                                x_bytes, res_bytes, w_bytes, sublane, tm=tm)
    grid = (_cdiv(n_tok, tm),)

    out = pl.pallas_call(
        _lora_kernel,
        out_shape=jax.ShapeDtypeStruct((n_tok, out_features), residual.dtype),
        grid_spec=pltpu.PrefetchScalarGridSpec(
            num_scalar_prefetch=0,
            grid=grid,
            in_specs=[
                pl.BlockSpec((tm, out_features), lambda i: (i, 0)),   # residual
                pl.BlockSpec((tm, in_features), lambda i: (i, 0)),    # hidden_states
                pl.BlockSpec((in_features, r), lambda i: (0, 0)),     # A^T (in, r)
                pl.BlockSpec((r, out_features), lambda i: (0, 0)),    # B^T * scaling
            ],
            out_specs=pl.BlockSpec((tm, out_features), lambda i: (i, 0)),
        ),
        compiler_params=pltpu.CompilerParams(
            dimension_semantics=("parallel",),
            vmem_limit_bytes=vmem_limit,
        ),
        # Reuse the residual HBM buffer for the output when the caller donates
        # it (zero-copy only if actually donated at the jit boundary).
        input_output_aliases=({0: 0} if alias_residual else {}),
    )(residual, hidden_states, a_t, b_t)
    return out


if __name__ == "__main__":
    # Module config (synthetic, deterministic init, small shapes).
    batch, seq = 2, 8
    in_features, out_features = 32, 32
    lora_r, lora_alpha = 8, 16
    use_rslora = False
    scaling = lora_alpha / math.sqrt(lora_r) if use_rslora else lora_alpha / lora_r

    key = jax.random.PRNGKey(0)
    k_res, k_hid, k_a, k_b = jax.random.split(key, 4)

    n_tok = batch * seq
    residual = jax.random.normal(k_res, (n_tok, out_features), dtype=jnp.float32)
    hidden_states = jax.random.normal(k_hid, (n_tok, in_features), dtype=jnp.float32)

    # lora_a_: kaiming_uniform(a=sqrt(5)) => U(-1/sqrt(fan_in), 1/sqrt(fan_in)).
    bound = 1.0 / math.sqrt(in_features)
    lora_a_w = jax.random.uniform(
        k_a, (lora_r, in_features), minval=-bound, maxval=bound, dtype=jnp.float32)
    # lora_b_: zeros in reset_parameters(); small random values here so the
    # compute path is exercised non-trivially (deterministic in-script init).
    lora_b_w = 0.01 * jax.random.normal(k_b, (out_features, lora_r), dtype=jnp.float32)

    # Reference in plain JAX (mirrors the PyTorch forward).
    ref = residual + (hidden_states.astype(jnp.float32) @ lora_a_w.T @ lora_b_w.T
                      * scaling).astype(residual.dtype)

    # Full (even) token count.
    out = jax.block_until_ready(
        lora_forward(residual, hidden_states, lora_a_w, lora_b_w, scaling))
    assert out.shape == (n_tok, out_features)
    assert jnp.allclose(out, ref, atol=1e-5, rtol=1e-5), "mismatch vs reference"

    # Ragged token count: exercises the cdiv grid / masked partial last block
    # (no host-side padding or output slicing).
    n_rag = 13
    out_rag = jax.block_until_ready(
        lora_forward(residual[:n_rag], hidden_states[:n_rag],
                     lora_a_w, lora_b_w, scaling))
    assert out_rag.shape == (n_rag, out_features)
    assert jnp.allclose(out_rag, ref[:n_rag], atol=1e-5, rtol=1e-5), \
        "ragged mismatch vs reference"

    print("KERNEL_OK")
</pallas_src>

<mosaic_0001>
module attributes {stable_mosaic.version = 11 : i64} {
  func.func @_lora_kernel(%arg0: i32, %arg1: memref<8x32xf32, #tpu.memory_space<vmem>>, %arg2: memref<8x32xf32, #tpu.memory_space<vmem>>, %arg3: memref<32x8xf32, #tpu.memory_space<vmem>>, %arg4: memref<8x32xf32, #tpu.memory_space<vmem>>, %arg5: memref<8x32xf32, #tpu.memory_space<vmem>>) attributes {dimension_semantics = [#tpu.dimension_semantics<parallel>], iteration_bounds = array<i64: 2>, scalar_prefetch = 0 : i64, scratch_operands = 0 : i64, tpu.core_type = #tpu.core_type<tc>, window_params = [{transform_indices = @transform_0, window_bounds = array<i64: 8, 32>}, {transform_indices = @transform_1, window_bounds = array<i64: 8, 32>}, {pipeline_mode = #tpu.pipeline_mode<synchronous>, transform_indices = @transform_2, window_bounds = array<i64: 32, 8>}, {pipeline_mode = #tpu.pipeline_mode<synchronous>, transform_indices = @transform_3, window_bounds = array<i64: 8, 32>}, {transform_indices = @transform_4, window_bounds = array<i64: 8, 32>}]} {
    %c0 = arith.constant 0 : index
    %c0_0 = arith.constant 0 : index
    %0 = vector.load %arg2[%c0, %c0_0] : memref<8x32xf32, #tpu.memory_space<vmem>>, vector<8x32xf32>
    %c0_1 = arith.constant 0 : index
    %c0_2 = arith.constant 0 : index
    %1 = vector.load %arg3[%c0_1, %c0_2] : memref<32x8xf32, #tpu.memory_space<vmem>>, vector<32x8xf32>
    %cst = arith.constant dense<0.000000e+00> : vector<8x8xf32>
    %2 = tpu.matmul %0, %1, %cst {dimension_numbers = #tpu.dot_dimension_numbers<[1], [0], [0], [1], [0, 0, 1, 1], [], []>} : vector<8x32xf32>, vector<32x8xf32>, vector<8x8xf32> -> vector<8x8xf32>
    %c0_3 = arith.constant 0 : index
    %c0_4 = arith.constant 0 : index
    %3 = vector.load %arg4[%c0_3, %c0_4] : memref<8x32xf32, #tpu.memory_space<vmem>>, vector<8x32xf32>
    %cst_5 = arith.constant dense<0.000000e+00> : vector<8x32xf32>
    %4 = tpu.matmul %2, %3, %cst_5 {dimension_numbers = #tpu.dot_dimension_numbers<[1], [0], [0], [1], [0, 0, 1, 1], [], []>} : vector<8x8xf32>, vector<8x32xf32>, vector<8x32xf32> -> vector<8x32xf32>
    %c0_6 = arith.constant 0 : index
    %c0_7 = arith.constant 0 : index
    %5 = vector.load %arg1[%c0_6, %c0_7] : memref<8x32xf32, #tpu.memory_space<vmem>>, vector<8x32xf32>
    %6 = arith.addf %5, %4 : vector<8x32xf32>
    %c0_8 = arith.constant 0 : index
    %c0_9 = arith.constant 0 : index
    %7 = vector.load %arg5[%c0_8, %c0_9] : memref<8x32xf32, #tpu.memory_space<vmem>>, vector<8x32xf32>
    tpu.vector_store %arg5[%c0_8, %c0_9], %6 {strides = array<i32>} : memref<8x32xf32, #tpu.memory_space<vmem>>, vector<8x32xf32>,
    return
  }
  func.func @transform_0(%arg0: i32) -> (i32, i32) {
    %c0_i32 = arith.constant 0 : i32
    %c0_i32_0 = arith.constant 0 : i32
    return %arg0, %c0_i32 : i32, i32
  }
  func.func @transform_1(%arg0: i32) -> (i32, i32) {
    %c0_i32 = arith.constant 0 : i32
    %c0_i32_0 = arith.constant 0 : i32
    return %arg0, %c0_i32 : i32, i32
  }
  func.func @transform_2(%arg0: i32) -> (i32, i32) {
    %c0_i32 = arith.constant 0 : i32
    %c0_i32_0 = arith.constant 0 : i32
    %c0_i32_1 = arith.constant 0 : i32
    return %c0_i32, %c0_i32_0 : i32, i32
  }
  func.func @transform_3(%arg0: i32) -> (i32, i32) {
    %c0_i32 = arith.constant 0 : i32
    %c0_i32_0 = arith.constant 0 : i32
    %c0_i32_1 = arith.constant 0 : i32
    return %c0_i32, %c0_i32_0 : i32, i32
  }
  func.func @transform_4(%arg0: i32) -> (i32, i32) {
    %c0_i32 = arith.constant 0 : i32
    %c0_i32_0 = arith.constant 0 : i32
    return %arg0, %c0_i32 : i32, i32
  }
}

</mosaic_0001>

<llo_original>
// kernel: tpu_custom_call.1
$region0: #{tpu_custom_call.1}
  #allocation0 [shape = 'u32[]', space=smem, size = 0x4, offset = 0x4, fixed_abs, tag = 'smem constant byte address 0x4 - core index']
  #allocation1 [shape = 'u32[144,128]{1,0:T(1,128)}', space=vmem, size = 0x12000, scoped, tag = 'internal scratch']
  %s0 = inlined_call_operand.vmem [shape: f32[16,32], index: 0, kind: input, shape index: {}]
  %s1 = inlined_call_operand.vmem [shape: f32[16,32], index: 1, kind: input, shape index: {}]
  %s2 = inlined_call_operand.vmem [shape: f32[32,8], index: 2, kind: input, shape index: {}]
  %s3 = inlined_call_operand.vmem [shape: f32[8,32], index: 3, kind: input, shape index: {}]
  %s4 = inlined_call_operand.hbm [shape: f32[16,32], index: 4, kind: output, shape index: {}]
  %s5 = sld [smem:[#allocation0]]
  $region49: #{tpu_custom_call.1} parent=0
    _
  %s7 = ssub.s32 1, %s5
  %s8 = scalar_select 0, %s7, %s5
  $region1: #{tpu_custom_call.1} parent=0
    #allocation2 [shape = 'u8[8192]{0}', space=vmem, size = 0x2000, scoped, tag = 'output window, operand 0']
    #allocation3 [shape = 's32[2]{0}', space=sflag, size = 0x8, scoped, tag = 'scoped memory for tpu_custom_call.1']
    %9 = vsyncpa [#allocation3], 0
    %s10 = scalar_lea.sflag [#allocation3], 1
    %11 = vsyncpa %s10, 0
    loop: start=0, step=1, limit=4
    $region2: #{tpu_custom_call.1} parent=1 // loop_pre_header
      _
    $region3: #{tpu_custom_call.1} parent=1 // loop_header
      %s13 = sphi 0, %s17
      %p14 = scmp.ge.s32.totalorder %s13, 4
      %s23 = sphi 0, %s25
      %s26 = sphi 0, %s23
      %s27 = sphi 0, %s26
      %s43 = sphi 0, %s27
      %s49 = sphi 0, %s51
      %s52 = sphi 0, %s49
      %s53 = sphi 0, %s52
      %s69 = sphi 0, %s53
      %s73 = sphi 0, %s73
      %s75 = sphi 0, %s73
      %s76 = sphi 0, %s75
      %s90 = sphi 0, %s76
      %s94 = sphi 0, %s94
      %s96 = sphi 0, %s94
      %s97 = sphi 0, %s96
      %s111 = sphi 0, %s97
      %s117 = sphi 0, %s119
      %s120 = sphi 0, %s117
      %s121 = sphi 0, %s120
      %s137 = sphi 0, %s121
    $region4: #{tpu_custom_call.1} parent=1 // loop_header_branch
      %16 = sbr.rel (%p14) target = $region8
    $region5: #{tpu_custom_call.1} parent=1 // loop_body
      %s18 = ssub.s32 %s13, 1
      %s19 = ssub.s32 %s13, 2
      %s20 = sadd.s32 %s13, 1
      %s21 = ssub.s32 %s13, %s20
      %p22 = scmp.eq.s32.totalorder %s21, 0
      %s24 = sadd.s32 %s23, 1
      %s25 = scalar_select %p22, %s23, %s24
      %p28 = pneg %p22
      %p29 = scmp.eq.s32.totalorder %s13, 1
      %p30 = por %p28, %p29
      %p31 = scmp.ne.s32.totalorder %s23, %s26
      %p32 = scmp.eq.s32.totalorder %s13, 0
      %p33 = por %p31, %p32
      %p34 = scmp.ne.s32.totalorder %s23, %s26
      %p35 = scmp.eq.s32.totalorder %s18, 1
      %p36 = por %p34, %p35
      %p37 = scmp.ne.s32.totalorder %s26, %s27
      %p38 = scmp.eq.s32.totalorder %s18, 0
      %p39 = por %p37, %p38
      %p40 = scmp.ne.s32.totalorder %s26, %s27
      %p41 = scmp.eq.s32.totalorder %s19, 1
      %p42 = por %p40, %p41
      %p44 = scmp.ne.s32.totalorder %s27, %s43
      %p45 = scmp.eq.s32.totalorder %s19, 0
      %p46 = por %p44, %p45
      %s47 = ssub.s32 %s13, %s20
      %p48 = scmp.eq.s32.totalorder %s47, 0
      %s50 = sadd.s32 %s49, 1
      %s51 = scalar_select %p48, %s49, %s50
      %p54 = pneg %p48
      %p55 = scmp.eq.s32.totalorder %s13, 1
      %p56 = por %p54, %p55
      %p57 = scmp.ne.s32.totalorder %s49, %s52
      %p58 = scmp.eq.s32.totalorder %s13, 0
      %p59 = por %p57, %p58
      %p60 = scmp.ne.s32.totalorder %s49, %s52
      %p61 = scmp.eq.s32.totalorder %s18, 1
      %p62 = por %p60, %p61
      %p63 = scmp.ne.s32.totalorder %s52, %s53
      %p64 = scmp.eq.s32.totalorder %s18, 0
      %p65 = por %p63, %p64
      %p66 = scmp.ne.s32.totalorder %s52, %s53
      %p67 = scmp.eq.s32.totalorder %s19, 1
      %p68 = por %p66, %p67
      %p70 = scmp.ne.s32.totalorder %s53, %s69
      %p71 = scmp.eq.s32.totalorder %s19, 0
      %p72 = por %p70, %p71
      %s74 = sadd.s32 %s73, 1
      %p77 = scmp.eq.s32.totalorder %s13, 1
      %p78 = scmp.ne.s32.totalorder %s73, %s75
      %p79 = scmp.eq.s32.totalorder %s13, 0
      %p80 = por %p78, %p79
      %p81 = scmp.ne.s32.totalorder %s73, %s75
      %p82 = scmp.eq.s32.totalorder %s18, 1
      %p83 = por %p81, %p82
      %p84 = scmp.ne.s32.totalorder %s75, %s76
      %p85 = scmp.eq.s32.totalorder %s18, 0
      %p86 = por %p84, %p85
      %p87 = scmp.ne.s32.totalorder %s75, %s76
      %p88 = scmp.eq.s32.totalorder %s19, 1
      %p89 = por %p87, %p88
      %p91 = scmp.ne.s32.totalorder %s76, %s90
      %p92 = scmp.eq.s32.totalorder %s19, 0
      %p93 = por %p91, %p92
      %s95 = sadd.s32 %s94, 1
      %p98 = scmp.eq.s32.totalorder %s13, 1
      %p99 = scmp.ne.s32.totalorder %s94, %s96
      %p100 = scmp.eq.s32.totalorder %s13, 0
      %p101 = por %p99, %p100
      %p102 = scmp.ne.s32.totalorder %s94, %s96
      %p103 = scmp.eq.s32.totalorder %s18, 1
      %p104 = por %p102, %p103
      %p105 = scmp.ne.s32.totalorder %s96, %s97
      %p106 = scmp.eq.s32.totalorder %s18, 0
      %p107 = por %p105, %p106
      %p108 = scmp.ne.s32.totalorder %s96, %s97
      %p109 = scmp.eq.s32.totalorder %s19, 1
      %p110 = por %p108, %p109
      %p112 = scmp.ne.s32.totalorder %s97, %s111
      %p113 = scmp.eq.s32.totalorder %s19, 0
      %p114 = por %p112, %p113
      %s115 = ssub.s32 %s13, %s20
      %p116 = scmp.eq.s32.totalorder %s115, 0
      %s118 = sadd.s32 %s117, 1
      %s119 = scalar_select %p116, %s117, %s118
      %p122 = pneg %p116
      %p123 = scmp.eq.s32.totalorder %s13, 1
      %p124 = por %p122, %p123
      %p125 = scmp.ne.s32.totalorder %s117, %s120
      %p126 = scmp.eq.s32.totalorder %s13, 0
      %p127 = por %p125, %p126
      %p128 = scmp.ne.s32.totalorder %s117, %s120
      %p129 = scmp.eq.s32.totalorder %s18, 1
      %p130 = por %p128, %p129
      %p131 = scmp.ne.s32.totalorder %s120, %s121
      %p132 = scmp.eq.s32.totalorder %s18, 0
      %p133 = por %p131, %p132
      %p134 = scmp.ne.s32.totalorder %s120, %s121
      %p135 = scmp.eq.s32.totalorder %s19, 1
      %p136 = por %p134, %p135
      %p138 = scmp.ne.s32.totalorder %s121, %s137
      %p139 = scmp.eq.s32.totalorder %s19, 0
      %p140 = por %p138, %p139
      %p141 = scmp.le.s32.totalorder 1, %s13
      %p142 = scmp.lt.s32.totalorder %s13, 3
      %p143 = pnand %p141, %p142
      %p144 = pneg %p143
      // Predicated region
      $region9: #{tpu_custom_call.1} parent=5 // pred_check
        _
      $region10: #{tpu_custom_call.1} parent=5 // pred_check_branch
        %146 = sbr.rel (%p143) target = $region12
      $region11: #{tpu_custom_call.1} parent=5 // pred_region
        %s147 = ssub.s32 %s13, 1
        // Predicated region
        $region13: #{tpu_custom_call.1} parent=11 // pred_check
          %p148 = pneg %p86
        $region14: #{tpu_custom_call.1} parent=11 // pred_check_branch
          %150 = sbr.rel (%p148) target = $region16
        $region15: #{tpu_custom_call.1} parent=11 // pred_region
          _
        $region16: #{tpu_custom_call.1} parent=11 // pred_fallthru
          _
        // Predicated region
        $region17: #{tpu_custom_call.1} parent=11 // pred_check
          %p151 = pneg %p107
        $region18: #{tpu_custom_call.1} parent=11 // pred_check_branch
          %153 = sbr.rel (%p151) target = $region20
        $region19: #{tpu_custom_call.1} parent=11 // pred_region
          _
        $region20: #{tpu_custom_call.1} parent=11 // pred_fallthru
          _
      $region12: #{tpu_custom_call.1} parent=5 // pred_fallthru
        _
      %p154 = scmp.lt.s32.totalorder %s13, 2
      // Predicated region
      $region21: #{tpu_custom_call.1} parent=5 // pred_check
        %p155 = pneg %p154
      $region22: #{tpu_custom_call.1} parent=5 // pred_check_branch
        %157 = sbr.rel (%p155) target = $region24
      $region23: #{tpu_custom_call.1} parent=5 // pred_region
        // Predicated region
        $region25: #{tpu_custom_call.1} parent=23 // pred_check
          %p158 = pneg %p33
        $region26: #{tpu_custom_call.1} parent=23 // pred_check_branch
          %160 = sbr.rel (%p158) target = $region28
        $region27: #{tpu_custom_call.1} parent=23 // pred_region
          %p161 = scmp.lt.s32.totalorder %s13, 1
          %s162 = scalar_select %p161, %s13, 1
          %s163 = smul.addr %s162, 8
          %s164 = scalar_lea.vmem %s0, %s163
        $region28: #{tpu_custom_call.1} parent=23 // pred_fallthru
          _
        // Predicated region
        $region29: #{tpu_custom_call.1} parent=23 // pred_check
          %p165 = pneg %p59
        $region30: #{tpu_custom_call.1} parent=23 // pred_check_branch
          %167 = sbr.rel (%p165) target = $region32
        $region31: #{tpu_custom_call.1} parent=23 // pred_region
          %p168 = scmp.lt.s32.totalorder %s13, 1
          %s169 = scalar_select %p168, %s13, 1
          %s170 = smul.addr %s169, 8
          %s171 = scalar_lea.vmem %s1, %s170
        $region32: #{tpu_custom_call.1} parent=23 // pred_fallthru
          _
      $region24: #{tpu_custom_call.1} parent=5 // pred_fallthru
        _
      %p172 = scmp.le.s32.totalorder 1, %s13
      %p173 = scmp.lt.s32.totalorder %s13, 3
      %p174 = pnand %p172, %p173
      %p175 = pneg %p174
      // Predicated region
      $region33: #{tpu_custom_call.1} parent=5 // pred_check
        _
      $region34: #{tpu_custom_call.1} parent=5 // pred_check_branch
        %177 = sbr.rel (%p174) target = $region36
      $region35: #{tpu_custom_call.1} parent=5 // pred_region
        %s178 = ssub.s32 %s13, 1
        %p179 = scmp.lt.s32.totalorder %s18, 1
        %s180 = scalar_select %p179, %s18, 1
        %s181 = smul.addr %s180, 8
        %s182 = scalar_lea.vmem %s0, %s181
        %p183 = pneg %p39
        %p184 = pneg %p36
        %p185 = scmp.lt.s32.totalorder %s18, 1
        %s186 = scalar_select %p185, %s18, 1
        %s187 = smul.addr %s186, 8
        %s188 = scalar_lea.vmem %s1, %s187
        %p189 = pneg %p65
        %p190 = pneg %p62
        %p191 = pneg %p86
        %p192 = pneg %p83
        %p193 = pneg %p107
        %p194 = pneg %p104
        %p195 = pneg %p133
        %p196 = pneg %p130
        %s197 = sand.u32 %s120, 1
        %s198 = scalar_lea.sflag [#allocation3], %s197
        %s199 = sand.u32 %s120, 1
        %s200 = smul.addr %s199, 8
        %s201 = scalar_lea.vmem [#allocation2], %s200
        %p202 = scmp.lt.s32.totalorder %s18, 1
        %s203 = scalar_select %p202, %s18, 1
        %s204 = smul.addr %s203, 8
        %s205 = scalar_lea.vmem %s0, %s204
        %p206 = scmp.lt.s32.totalorder %s18, 1
        %s207 = scalar_select %p206, %s18, 1
        %s208 = smul.addr %s207, 8
        %s209 = scalar_lea.vmem %s1, %s208
        %v210 = vld [vmem:[%s209] sm:$0xff]
        %v211 = vld [vmem:[%s2] sm:$0xff]
        %v212 = vld [vmem:[%s2 + $0x8] sm:$0xff]
        %v213 = vld [vmem:[%s2 + $0x10] sm:$0xff]
        %v214 = vld [vmem:[%s2 + $0x18] sm:$0xff]
        %vm215 = vcmask 261120
        %v217 = vsel %vm215, %v210, 0
        %219 = vmatprep.subr.mxu0 0.0
        %220 = vmatpush1.msra.mxu0 %v211
        %221 = vmatprep.subr.mxu0 0.0
        %222 = vmatpush1.msra.mxu0 %v212
        %223 = vmatprep.subr.mxu0 0.0
        %224 = vmatpush1.msra.mxu0 %v213
        %225 = vmatprep.subr.mxu0 0.0
        %226 = vmatpush1.msra.mxu0 %v214
        %227 = vmatprep.subr.mxu0 0.0
        %228 = vmatpush1.msra.mxu0 0.0
        %229 = vmatprep.subr.mxu0 0.0
        %230 = vmatpush1.msra.mxu0 0.0
        %231 = vmatprep.subr.mxu0 0.0
        %232 = vmatpush1.msra.mxu0 0.0
        %233 = vmatprep.subr.mxu0 0.0
        %234 = vmatpush1.msra.mxu0 0.0
        %235 = vmatprep.subr.mxu0 0.0
        %236 = vmatpush1.msra.mxu0 0.0
        %237 = vmatprep.subr.mxu0 0.0
        %238 = vmatpush1.msra.mxu0 0.0
        %239 = vmatprep.subr.mxu0 0.0
        %240 = vmatpush1.msra.mxu0 0.0
        %241 = vmatprep.subr.mxu0 0.0
        %242 = vmatpush1.msra.mxu0 0.0
        %243 = vmatprep.subr.mxu0 0.0
        %244 = vmatpush1.msra.mxu0 0.0
        %245 = vmatprep.subr.mxu0 0.0
        %246 = vmatpush1.msra.mxu0 0.0
        %247 = vmatprep.subr.mxu0 0.0
        %248 = vmatpush1.msra.mxu0 0.0
        %249 = vmatprep.subr.mxu0 0.0
        %250 = vmatpush1.msra.mxu0 0.0
        %251 = vmatprep.subr.mxu0 0.0
        %252 = vmatpush1.msra.mxu0 0.0
        %253 = vmatprep.subr.mxu0 0.0
        %254 = vmatpush1.msra.mxu0 0.0
        %255 = vmatprep.subr.mxu0 0.0
        %256 = vmatpush1.msra.mxu0 0.0
        %257 = vmatprep.subr.mxu0 0.0
        %258 = vmatpush1.msra.mxu0 0.0
        %259 = vmatprep.subr.mxu0 0.0
        %260 = vmatpush1.msra.mxu0 0.0
        %261 = vmatprep.subr.mxu0 0.0
        %262 = vmatpush1.msra.mxu0 0.0
        %263 = vmatprep.subr.mxu0 0.0
        %264 = vmatpush1.msra.mxu0 0.0
        %265 = vmatprep.subr.mxu0 0.0
        %266 = vmatpush1.msra.mxu0 0.0
        %267 = vmatprep.subr.mxu0 0.0
        %268 = vmatpush1.msra.mxu0 0.0
        %269 = vmatprep.subr.mxu0 0.0
        %270 = vmatpush1.msra.mxu0 0.0
        %271 = vmatprep.subr.mxu0 0.0
        %272 = vmatpush1.msra.mxu0 0.0
        %273 = vmatprep.subr.mxu0 0.0
        %274 = vmatpush1.msra.mxu0 0.0
        %275 = vmatprep.subr.mxu0 0.0
        %276 = vmatpush1.msra.mxu0 0.0
        %277 = vmatprep.subr.mxu0 0.0
        %278 = vmatpush1.msra.mxu0 0.0
        %279 = vmatprep.subr.mxu0 0.0
        %280 = vmatpush1.msra.mxu0 0.0
        %281 = vmatprep.subr.mxu0 0.0
        %282 = vmatpush1.msra.mxu0 0.0
        %283 = vmatprep.mubr.f32.mxu0 0.0
        %284 = vmatmul.mubr.f32.gmra.mrb[0].mxu0 %v217
        %v285 = vpop.f32.mrb[0].mxu0
        %v286 = vadd.f32 0.0, %v285
        %v287 = vpop.f32.mrb[0].mxu0
        %288 = vdwg.mxu0
        %v289 = vld [vmem:[%s3] sm:$0xff]
        %vm290 = vcmask 64512
        %v292 = vsel %vm290, %v286, 0
        %294 = vmatprep.subr.mxu0 0.0
        %295 = vmatpush1.msra.mxu0 %v289
        %296 = vmatprep.subr.mxu0 0.0
        %297 = vmatpush1.msra.mxu0 0.0
        %298 = vmatprep.subr.mxu0 0.0
        %299 = vmatpush1.msra.mxu0 0.0
        %300 = vmatprep.subr.mxu0 0.0
        %301 = vmatpush1.msra.mxu0 0.0
        %302 = vmatprep.subr.mxu0 0.0
        %303 = vmatpush1.msra.mxu0 0.0
        %304 = vmatprep.subr.mxu0 0.0
        %305 = vmatpush1.msra.mxu0 0.0
        %306 = vmatprep.subr.mxu0 0.0
        %307 = vmatpush1.msra.mxu0 0.0
        %308 = vmatprep.subr.mxu0 0.0
        %309 = vmatpush1.msra.mxu0 0.0
        %310 = vmatprep.subr.mxu0 0.0
        %311 = vmatpush1.msra.mxu0 0.0
        %312 = vmatprep.subr.mxu0 0.0
        %313 = vmatpush1.msra.mxu0 0.0
        %314 = vmatprep.subr.mxu0 0.0
        %315 = vmatpush1.msra.mxu0 0.0
        %316 = vmatprep.subr.mxu0 0.0
        %317 = vmatpush1.msra.mxu0 0.0
        %318 = vmatprep.subr.mxu0 0.0
        %319 = vmatpush1.msra.mxu0 0.0
        %320 = vmatprep.subr.mxu0 0.0
        %321 = vmatpush1.msra.mxu0 0.0
        %322 = vmatprep.subr.mxu0 0.0
        %323 = vmatpush1.msra.mxu0 0.0
        %324 = vmatprep.subr.mxu0 0.0
        %325 = vmatpush1.msra.mxu0 0.0
        %326 = vmatprep.subr.mxu0 0.0
        %327 = vmatpush1.msra.mxu0 0.0
        %328 = vmatprep.subr.mxu0 0.0
        %329 = vmatpush1.msra.mxu0 0.0
        %330 = vmatprep.subr.mxu0 0.0
        %331 = vmatpush1.msra.mxu0 0.0
        %332 = vmatprep.subr.mxu0 0.0
        %333 = vmatpush1.msra.mxu0 0.0
        %334 = vmatprep.subr.mxu0 0.0
        %335 = vmatpush1.msra.mxu0 0.0
        %336 = vmatprep.subr.mxu0 0.0
        %337 = vmatpush1.msra.mxu0 0.0
        %338 = vmatprep.subr.mxu0 0.0
        %339 = vmatpush1.msra.mxu0 0.0
        %340 = vmatprep.subr.mxu0 0.0
        %341 = vmatpush1.msra.mxu0 0.0
        %342 = vmatprep.subr.mxu0 0.0
        %343 = vmatpush1.msra.mxu0 0.0
        %344 = vmatprep.subr.mxu0 0.0
        %345 = vmatpush1.msra.mxu0 0.0
        %346 = vmatprep.subr.mxu0 0.0
        %347 = vmatpush1.msra.mxu0 0.0
        %348 = vmatprep.subr.mxu0 0.0
        %349 = vmatpush1.msra.mxu0 0.0
        %350 = vmatprep.subr.mxu0 0.0
        %351 = vmatpush1.msra.mxu0 0.0
        %352 = vmatprep.subr.mxu0 0.0
        %353 = vmatpush1.msra.mxu0 0.0
        %354 = vmatprep.subr.mxu0 0.0
        %355 = vmatpush1.msra.mxu0 0.0
        %356 = vmatprep.subr.mxu0 0.0
        %357 = vmatpush1.msra.mxu0 0.0
        %358 = vmatprep.mubr.f32.mxu0 0.0
        %359 = vmatmul.mubr.f32.gmra.mrb[0].mxu0 %v292
        %v360 = vpop.f32.mrb[0].mxu0
        %v361 = vadd.f32 0.0, %v360
        %v362 = vpop.f32.mrb[0].mxu0
        %363 = vdwg.mxu0
        %v364 = vld [vmem:[%s205] sm:$0xff]
        %v365 = vadd.f32 %v364, %v361
        %366 = vst.msk [vmem:[%s201] sm:$0xff] %vm215, %v365
        %s367 = sand.u32 %s120, 1
        %s368 = scalar_lea.sflag [#allocation3], %s367
        %s369 = sand.u32 %s120, 1
        %s370 = smul.addr %s369, 8
        %s371 = scalar_lea.vmem [#allocation2], %s370
        // Predicated region
        $region37: #{tpu_custom_call.1} parent=35 // pred_check
          %p372 = pneg %p130
        $region38: #{tpu_custom_call.1} parent=35 // pred_check_branch
          %374 = sbr.rel (%p372) target = $region40
        $region39: #{tpu_custom_call.1} parent=35 // pred_region
          %s376 = ssub.s32 128, 128
          %377 = vsyncadd %s368, %s376
          %s378 = smul.addr %s18, 128
          %s379 = scalar_lea.hbm %s4, %s378
          %s381 = sshll.u32 %s371, 4
          %s382 = int_to_ptr.vmem [resolvable:$true] %s381
          %384 = dma.vmem_to_hbm [thread:$0]  %s382, 128, %s379, %s368
        $region40: #{tpu_custom_call.1} parent=35 // pred_fallthru
          _
      $region36: #{tpu_custom_call.1} parent=5 // pred_fallthru
        _
      %p385 = scmp.le.s32.totalorder 2, %s13
      // Predicated region
      $region41: #{tpu_custom_call.1} parent=5 // pred_check
        %p386 = pneg %p385
      $region42: #{tpu_custom_call.1} parent=5 // pred_check_branch
        %388 = sbr.rel (%p386) target = $region44
      $region43: #{tpu_custom_call.1} parent=5 // pred_region
        %s389 = ssub.s32 %s13, 2
        // Predicated region
        $region45: #{tpu_custom_call.1} parent=43 // pred_check
          %p390 = pneg %p136
        $region46: #{tpu_custom_call.1} parent=43 // pred_check_branch
          %392 = sbr.rel (%p390) target = $region48
        $region47: #{tpu_custom_call.1} parent=43 // pred_region
          %s393 = sand.u32 %s121, 1
          %s394 = scalar_lea.sflag [#allocation3], %s393
          %s395 = sand.u32 %s121, 1
          %s396 = smul.addr %s395, 8
          %s397 = scalar_lea.vmem [#allocation2], %s396
          %398 = dma.done %s394, 128
        $region48: #{tpu_custom_call.1} parent=43 // pred_fallthru
          _
      $region44: #{tpu_custom_call.1} parent=5 // pred_fallthru
        _
    $region6: #{tpu_custom_call.1} parent=1 // loop_footer
      %s17 = sadd.s32 1, %s13
    $region7: #{tpu_custom_call.1} parent=1 // loop_footer_branch
      %12 = sbr.rel target = $region3
    $region8: #{tpu_custom_call.1} parent=1 // loop_exit
      _
    %399 = vsyncpa [#allocation3], 1
    %s400 = scalar_lea.sflag [#allocation3], 1
    %401 = vsyncpa %s400, 1

</llo_original>
